<compile_context>
chip_gen: v6e
topology: v6e:2x2x1
jax: 0.10.0
libtpu: 0.0.40
codegen_flags: <defaults>
</compile_context>

<pallas_src>
import math

import numpy as np
import jax
import jax.numpy as jnp
from jax.experimental import pallas as pl
from jax.experimental.pallas import tpu as pltpu

MXU_DTYPE = jnp.bfloat16      # classifier / filter-factory MXU operands (f32 accumulate)
DFT_DTYPE = jnp.float32       # rfft + folded mix_layer/irfft dots (accuracy-critical)
SEQ_DTYPE = jnp.bfloat16      # normalized [xn | yhn] slab and gathered leader sequences


def _round_up(v, m):
    return ((v + m - 1) // m) * m


# ------------------------------------------------------------------ DFT matrices
def make_dft_matrices(H):
    """rfft / irfft of length-H real signals as matmuls (exact, torch conventions)."""
    F = H // 2 + 1
    n = np.arange(H)[:, None]
    f = np.arange(F)[None, :]
    ang = 2.0 * np.pi * n * f / H
    Wc = np.cos(ang).astype(np.float32)                 # (H, F):  Re{rfft}
    Ws = (-np.sin(ang)).astype(np.float32)              # (H, F):  Im{rfft}
    w = np.full((F,), 2.0, np.float32)
    w[0] = 1.0
    if H % 2 == 0:
        w[-1] = 1.0
    ang2 = 2.0 * np.pi * np.arange(F)[:, None] * np.arange(H)[None, :] / H
    Ic = (w[:, None] * np.cos(ang2) / H).astype(np.float32)    # (F, H)
    Is = (-w[:, None] * np.sin(ang2) / H).astype(np.float32)   # (F, H)
    return jnp.asarray(Wc), jnp.asarray(Ws), jnp.asarray(Ic), jnp.asarray(Is)


# ------------------------------------------------------------------- tile sizing
def _pick_tile_rows(R, L, Hp, Fp, K, vmem_budget_bytes=20 << 20):
    """Rows per grid tile: 8-aligned, >= 2 tiles when possible (v7x dual-TC sharding),
    capped by a rough per-row VMEM estimate (v5e's 16 MiB scoped default binds first)."""
    Gp = (2 * K + 1) * Fp
    per_row_f32 = (L + 2 * Hp                    # x, y, out
                   + (K + 1) * (Hp + 2 * Fp)     # stacked rfft input + spectrum
                   + 2 * Gp                      # filt accumulator + one partial product
                   + 6 * Fp + Hp)                # z and delta
    cap = max(8, ((vmem_budget_bytes // (4 * per_row_f32)) // 8) * 8)
    want = 8 if R <= 8 else min(256, _round_up((R + 1) // 2, 8))
    # TODO(synk): on v6e (128 MiB VMEM) TR could be raised to 512 for large R.
    return int(max(8, min(want, cap)))


# ----------------------------------------------------------- kernel 1: instance norm
def _make_instnorm_kernel(L, H, LHp):
    pad = LHp - (L + H)

    def kernel(x_ref, y_ref, seq_ref):
        x = x_ref[...]                                             # (TR, L)
        y = y_ref[...]                                             # (TR, Hp) zero-padded
        mu = jnp.mean(x, axis=-1, keepdims=True)
        xc = x - mu
        std = jnp.sqrt(jnp.mean(xc * xc, axis=-1, keepdims=True) + 1e-8)
        inv = 1.0 / std
        parts = [xc * inv, (y[:, :H] - mu) * inv]
        if pad:
            parts.append(jnp.zeros((x.shape[0], pad), jnp.float32))
        # single lane-dense bf16 slab: [x_norm | y_hat_norm | 0-pad]
        seq_ref[...] = jnp.concatenate(parts, axis=-1).astype(SEQ_DTYPE)

    return kernel


def instance_norm_seq(x2, y2, L, H, LHp, tile_rows):
    Rp = x2.shape[0]
    n_tiles = Rp // tile_rows
    Hp = y2.shape[-1]
    return pl.pallas_call(
        _make_instnorm_kernel(L, H, LHp),
        out_shape=jax.ShapeDtypeStruct((Rp, LHp), SEQ_DTYPE),
        grid=(n_tiles,),
        in_specs=[pl.BlockSpec((tile_rows, L), lambda i: (i, 0)),
                  pl.BlockSpec((tile_rows, Hp), lambda i: (i, 0))],
        out_specs=pl.BlockSpec((tile_rows, LHp), lambda i: (i, 0)),
        compiler_params=pltpu.CompilerParams(
            dimension_semantics=("parallel",),
            vmem_limit_bytes=32 * 1024 * 1024),
    )(x2, y2)


# --------------------------------------------------------------- kernel 2: refiner
def _make_refine_kernel(K, S, Fp, Hp, TR):
    Gp = (2 * K + 1) * Fp   # lane-aligned per-leader filter stride

    def kernel(x_ref, y_ref, ss_ref, pk_ref,
               clsw_ref, mh_ref, wcs_ref, wmixi_ref, bi_ref, out_ref):
        x = x_ref[...]                                         # (TR, L)   raw lookback
        y = y_ref[...]                                         # (TR, Hp)  raw y_hat (0 tail)
        pk = pk_ref[...]                                       # (TR, K+1+S) packed scalars

        # --- instance norm (recomputed in-register; never round-trips HBM) --------
        mu = jnp.mean(x, axis=-1, keepdims=True)
        xc = x - mu
        std = jnp.sqrt(jnp.mean(xc * xc, axis=-1, keepdims=True) + 1e-8)
        inv_std = 1.0 / std
        yhn = (y - mu) * inv_std                               # tail lanes junk; killed by
                                                               # zero rows of Wcs below.

        # --- softmax over [ |r|/T , 1/T ]; keep only the K leader entries ----------
        ra = pk[:, :K + 1]
        m = jnp.max(ra, axis=-1, keepdims=True)
        e = jnp.exp(ra - m)
        corr = e[:, :K] * pl.reciprocal(jnp.sum(e, axis=-1, keepdims=True), approx=True)

        # --- FilterFactory: classifier + state softmax -----------------------------
        logits = pk[:, K + 1:] + jnp.dot(x.astype(MXU_DTYPE), clsw_ref[...],
                                         preferred_element_type=jnp.float32)  # (TR, S)
        pm = jnp.max(logits, axis=-1, keepdims=True)
        pe = jnp.exp(logits - pm)
        p = pe * pl.reciprocal(jnp.sum(pe, axis=-1, keepdims=True), approx=True)

        # accumulating mix-head: filt = p@B + sum_k (corr_k * p)@W_k  (one live buffer)
        filt = jnp.dot(p.astype(MXU_DTYPE), mh_ref[:, :Gp],
                       preferred_element_type=jnp.float32)     # (TR, Gp)
        for k in range(K):
            pk_s = (corr[:, k:k + 1] * p).astype(MXU_DTYPE)
            filt = filt + jnp.dot(pk_s, mh_ref[:, (k + 1) * Gp:(k + 2) * Gp],
                                  preferred_element_type=jnp.float32)
        # slot j filter = filt[:, j*Fp:(j+1)*Fp]  (128-lane aligned)

        # --- fused rfft of [y_hat_norm ; leader_0 ; ... ; leader_{K-1}] ------------
        stacked = jnp.concatenate(
            [yhn.astype(DFT_DTYPE)] + [ss_ref[k].astype(DFT_DTYPE) for k in range(K)],
            axis=0)                                            # ((K+1)*TR, Hp)
        sp = jnp.dot(stacked, wcs_ref[...],
                     preferred_element_type=jnp.float32)       # ((K+1)*TR, 2Fp)
        y_re, y_im = sp[:TR, :Fp], sp[:TR, Fp:]

        sf_re = jnp.zeros_like(y_re)
        sf_im = jnp.zeros_like(y_im)
        df_re = jnp.zeros_like(y_re)
        df_im = jnp.zeros_like(y_im)
        for k in range(K):
            lo = (k + 1) * TR
            s_re, s_im = sp[lo:lo + TR, :Fp], sp[lo:lo + TR, Fp:]
            fk = filt[:, k * Fp:(k + 1) * Fp]
            gk = filt[:, (K + k) * Fp:(K + k + 1) * Fp]
            fs_re = s_re * fk
            fs_im = s_im * fk
            sf_re = sf_re + fs_re
            sf_im = sf_im + fs_im
            df_re = df_re + (fs_re - y_re) * gk
            df_im = df_im + (fs_im - y_im) * gk
        fl = filt[:, 2 * K * Fp:]
        yf_re = y_re * fl
        yf_im = y_im * fl

        # --- complex mix_layer + irfft, folded into a single dot --------------------
        z = jnp.concatenate([sf_re, df_re, yf_re, sf_im, df_im, yf_im], axis=-1)  # (TR, 6Fp)
        delta = (jnp.dot(z.astype(DFT_DTYPE), wmixi_ref[...],
                         preferred_element_type=jnp.float32)
                 + bi_ref[...])                                # (TR, Hp), zero tail

        # (yhn + delta) * std + mu  ==  y + delta * std ; lane-dense (TR, Hp) store
        out_ref[...] = y + delta * std

    return kernel


# ------------------------------------------------------------------------ parameters
def init_params(key, seq_len, pred_len, C, K, S, temperature=1.0):
    F = pred_len // 2 + 1
    out_dim = F * (2 * K + 1)
    ks = jax.random.split(key, 10)

    def u(k, shape, bound):
        return jax.random.uniform(k, shape, jnp.float32, -bound, bound)

    return dict(
        temperature=jnp.full((1, 1), temperature, jnp.float32),
        classifier_wT=u(ks[0], (seq_len, S), 1.0 / math.sqrt(seq_len)),   # Linear(L->S).weight^T
        basic_state=u(ks[1], (C, S), 1.0 / math.sqrt(S)),
        fbias=u(ks[2], (1, S), 1.0 / math.sqrt(seq_len)),
        mix_head_w=u(ks[3], (S, K * out_dim), 1.0 / math.sqrt(K)),
        mix_head_b=u(ks[4], (S, out_dim), 1.0 / math.sqrt(K)),
        mix_w_re=u(ks[5], (F, 3 * F), 1.0 / math.sqrt(3 * F)),            # complex Linear(3F->F)
        mix_w_im=u(ks[6], (F, 3 * F), 1.0 / math.sqrt(3 * F)),
        mix_b_re=u(ks[7], (1, F), 1.0 / math.sqrt(3 * F)),
        mix_b_im=u(ks[8], (1, F), 1.0 / math.sqrt(3 * F)),
    )


# --------------------------------------------------------------------------- forward
def lift_forward(params, x, y_hat, leader_ids, shift, r, K, single_buffer_consts=True):
    """Model.forward: x (B, L, C), y_hat (B, H, C) -> (B, H, C)."""
    B, L, C = x.shape
    H = y_hat.shape[1]
    assert H % 2 == 0, "pred_len must be even (irfft default length)"
    F = H // 2 + 1
    S = params["basic_state"].shape[-1]
    Fp = _round_up(F, 128)
    Hp = _round_up(H, 128)
    LHp = _round_up(L + H, 128)
    Gp = (2 * K + 1) * Fp
    R = B * C

    TR = _pick_tile_rows(R, L, Hp, Fp, K)
    Rp = _round_up(R, TR)
    n_tiles = Rp // TR

    # ---- channels-first, time-on-lanes layout; zero row / lane padding ------------
    x2 = jnp.transpose(x, (0, 2, 1)).reshape(R, L).astype(jnp.float32)
    y2 = jnp.transpose(y_hat, (0, 2, 1)).reshape(R, H).astype(jnp.float32)
    x2 = jnp.pad(x2, ((0, Rp - R), (0, 0)))                       # (Rp, L)
    y2 = jnp.pad(y2, ((0, Rp - R), (0, Hp - H)))                  # (Rp, Hp)

    # kernel 1: bf16 normalized [xn | yhn] slab feeding the leader gather
    seq = instance_norm_seq(x2, y2, L, H, LHp, TR)                # (Rp, LHp) bf16

    # ---- leader gather (XLA glue; under torch.no_grad in the original) ------------
    # TODO(synk): `shifted_leader_seq` is not defined in the provided source; this is the
    # standard LIFT leader-channel gather + lag shift from (leader_ids, shift).  A single
    # fused advanced-index gather emits (K, Rp, Hp) directly (no (R,K,L+H) intermediate,
    # no transpose copy).  An in-kernel scalar-prefetch + make_async_copy version could
    # remove the HBM round trip entirely (left as future work).
    lead_rows = (jnp.arange(B, dtype=jnp.int32)[:, None, None] * C
                 + leader_ids.astype(jnp.int32)).reshape(R, K)
    lead_rows_t = jnp.pad(lead_rows, ((0, Rp - R), (0, 0))).T               # (K, Rp)
    shift_t = jnp.pad(shift.astype(jnp.int32).reshape(R, K),
                      ((0, Rp - R), (0, 0))).T                              # (K, Rp)
    j = jnp.arange(Hp, dtype=jnp.int32)
    col = jnp.where(j[None, None, :] < H,
                    (L + j)[None, None, :] - shift_t[:, :, None], 0)        # (K, Rp, Hp)
    ssk = seq[lead_rows_t[:, :, None], col]                                 # (K, Rp, Hp) bf16
    # (columns >= H index a dummy position; they hit zero rows of Wcs below)

    # ---- host-side constant folding (every F / G slot padded to a 128-lane stride) -
    Wc, Ws, Ic, Is = make_dft_matrices(H)
    wcs = jnp.zeros((Hp, 2 * Fp), jnp.float32)
    wcs = wcs.at[:H, :F].set(Wc).at[:H, Fp:Fp + F].set(Ws).astype(DFT_DTYPE)  # [Re | Im]

    WreT = params["mix_w_re"].T                                   # (3F, F)
    WimT = params["mix_w_im"].T
    Wmix = jnp.concatenate(
        [jnp.concatenate([WreT, WimT], axis=1),
         jnp.concatenate([-WimT, WreT], axis=1)], axis=0)         # (6F, 2F)
    Iall = jnp.concatenate([Ic, Is], axis=0)                      # (2F, H)
    wmixi_core = jnp.dot(Wmix, Iall).reshape(6, F, H)             # mix_layer + irfft folded
    wmixi = (jnp.zeros((6, Fp, Hp), jnp.float32)
             .at[:, :F, :H].set(wmixi_core)
             .reshape(6 * Fp, Hp).astype(DFT_DTYPE))
    bi = jnp.zeros((1, Hp), jnp.float32).at[:, :H].set(
        jnp.dot(jnp.concatenate([params["mix_b_re"], params["mix_b_im"]], axis=1), Iall))

    mh = jnp.zeros((S, K + 1, 2 * K + 1, Fp), jnp.float32)
    mh = mh.at[:, 0, :, :F].set(params["mix_head_b"].reshape(S, 2 * K + 1, F))
    mh = mh.at[:, 1:, :, :F].set(params["mix_head_w"].reshape(S, K, 2 * K + 1, F))
    mh = mh.reshape(S, (K + 1) * Gp).astype(MXU_DTYPE)            # [bias | W_0 | ... | W_{K-1}]
    clsw = params["classifier_wT"].astype(MXU_DTYPE)              # (L, S)

    # packed per-row scalars: [ |r|/T (K) | 1/T (1) | basic_state + fbias (S) ]
    # TODO(synk): at large R the (C,S) basic-state table could be broadcast in-kernel
    # (channel-aligned tiles) instead of being tiled to (R,S) here.
    inv_t = 1.0 / params["temperature"][0, 0]
    pk = jnp.concatenate(
        [jnp.abs(r).reshape(R, K).astype(jnp.float32) * inv_t,
         jnp.broadcast_to(inv_t, (R, 1)).astype(jnp.float32),
         jnp.tile(params["basic_state"] + params["fbias"], (B, 1))], axis=-1)
    pk = jnp.pad(pk, ((0, Rp - R), (0, 0)))                       # (Rp, K+1+S)

    def const_spec(shape):
        # constant blocks: fetched once; single-buffer them when supported
        if single_buffer_consts:
            return pl.BlockSpec(shape, lambda i: (0,) * len(shape),
                                pipeline_mode=pl.Buffered(1))
        return pl.BlockSpec(shape, lambda i: (0,) * len(shape))

    kernel = _make_refine_kernel(K=K, S=S, Fp=Fp, Hp=Hp, TR=TR)
    out2 = pl.pallas_call(
        kernel,
        out_shape=jax.ShapeDtypeStruct((Rp, Hp), jnp.float32),
        grid=(n_tiles,),
        in_specs=[
            pl.BlockSpec((TR, L), lambda i: (i, 0)),              # raw lookback
            pl.BlockSpec((TR, Hp), lambda i: (i, 0)),             # raw y_hat (lane-padded)
            pl.BlockSpec((K, TR, Hp), lambda i: (0, i, 0)),       # shifted leader seqs (bf16)
            pl.BlockSpec((TR, K + 1 + S), lambda i: (i, 0)),      # packed per-row scalars
            const_spec((L, S)),                                   # classifier W^T
            const_spec((S, (K + 1) * Gp)),                        # [mix_head_b | mix_head_w]
            const_spec((Hp, 2 * Fp)),                             # [Wc | Ws] (zero tail rows)
            const_spec((6 * Fp, Hp)),                             # Wmix @ [Ic; Is]
            const_spec((1, Hp)),                                  # bmix @ [Ic; Is]
        ],
        out_specs=pl.BlockSpec((TR, Hp), lambda i: (i, 0)),
        compiler_params=pltpu.CompilerParams(
            dimension_semantics=("parallel",),
            vmem_limit_bytes=32 * 1024 * 1024),
    )(x2, y2, ssk, pk, clsw, mh, wcs, wmixi, bi)

    out = out2[:R, :H].reshape(B, C, H)
    return jnp.transpose(out, (0, 2, 1))                          # (B, H, C)


# -------------------------------------------------------------- pure-JAX reference
def lift_reference(params, x, y_hat, leader_ids, shift, r, K):
    B, L, C = x.shape
    H = y_hat.shape[1]
    F = H // 2 + 1
    out_dim = F * (2 * K + 1)
    xc = jnp.transpose(x, (0, 2, 1)).astype(jnp.float32)
    yc = jnp.transpose(y_hat, (0, 2, 1)).astype(jnp.float32)
    mu = jnp.mean(xc, axis=-1, keepdims=True)
    xcent = xc - mu
    std = jnp.sqrt(jnp.mean(xcent ** 2, axis=-1, keepdims=True) + 1e-8)
    xn = xcent / std
    yhn = (yc - mu) / std

    seq = jnp.concatenate([xn, yhn], axis=-1)
    b_idx = jnp.arange(B)[:, None, None]
    seq_leader = seq[b_idx, leader_ids]
    const_indices = jnp.arange(L, L + H, dtype=jnp.int32)[None, None, None, :]
    idx = const_indices - shift[..., None]
    ss = jnp.take_along_axis(seq_leader, idx, axis=-1)                   # (B, C, K, H)

    temp = params["temperature"][0, 0]
    r_full = jnp.concatenate([jnp.ones((B, C, 1), jnp.float32), jnp.abs(r)], axis=-1) / temp
    corr = jax.nn.softmax(r_full, axis=-1)[..., 1:]

    logits = (params["fbias"] + params["basic_state"]
              + jnp.einsum('bcl,ls->bcs', xc, params["classifier_wT"]))
    p = jax.nn.softmax(logits, axis=-1)
    weight = jnp.einsum('bcs,so->bco', p, params["mix_head_w"]).reshape(B, C, K, out_dim)
    bias_f = jnp.einsum('bcs,so->bco', p, params["mix_head_b"])
    filt = jnp.einsum('bck,bcko->bco', corr, weight) + bias_f
    filters = filt.reshape(B, C, 2 * K + 1, F)

    Wc, Ws, Ic, Is = make_dft_matrices(H)
    y_re = jnp.einsum('bch,hf->bcf', yhn, Wc)
    y_im = jnp.einsum('bch,hf->bcf', yhn, Ws)
    s_re = jnp.einsum('bckh,hf->bckf', ss, Wc)
    s_im = jnp.einsum('bckh,hf->bckf', ss, Ws)
    fK = filters[:, :, :K]
    sf_re = s_re * fK
    sf_im = s_im * fK
    gK = filters[:, :, K:2 * K]
    df_re = (sf_re - y_re[:, :, None]) * gK
    df_im = (sf_im - y_im[:, :, None]) * gK
    flast = filters[:, :, -1]
    yf_re = y_re * flast
    yf_im = y_im * flast
    z_re = jnp.concatenate([sf_re.sum(2), df_re.sum(2), yf_re], axis=-1)
    z_im = jnp.concatenate([sf_im.sum(2), df_im.sum(2), yf_im], axis=-1)
    Wre, Wim = params["mix_w_re"], params["mix_w_im"]
    o_re = (jnp.einsum('bcf,of->bco', z_re, Wre) - jnp.einsum('bcf,of->bco', z_im, Wim)
            + params["mix_b_re"])
    o_im = (jnp.einsum('bcf,of->bco', z_re, Wim) + jnp.einsum('bcf,of->bco', z_im, Wre)
            + params["mix_b_im"])
    delta = jnp.einsum('bcf,fh->bch', o_re, Ic) + jnp.einsum('bcf,fh->bch', o_im, Is)
    y_out = (yhn + delta) * std + mu
    return jnp.transpose(y_out, (0, 2, 1))


# ------------------------------------------------------------------------------ main
if __name__ == "__main__":
    B, L, H = 2, 16, 16          # batch, seq_len, pred_len
    enc_in, in_dim = 3, 2
    C = enc_in * in_dim          # channels = 6
    K = min(3, C)                # leader_num = 3
    S = 4                        # state_num

    key = jax.random.PRNGKey(0)
    kx, ky, kl, ksft, kr, kp = jax.random.split(key, 6)
    x = jax.random.normal(kx, (B, L, C), jnp.float32)
    # TODO(synk): `backbone` is not provided by the module; y_hat is passed explicitly,
    # which Model.forward supports directly.
    y_hat = jax.random.normal(ky, (B, H, C), jnp.float32)
    leader_ids = jax.random.randint(kl, (B, C, K), 0, C)
    shift = jax.random.randint(ksft, (B, C, K), 0, L)
    r = jax.random.uniform(kr, (B, C, K), jnp.float32, -1.0, 1.0)
    params = init_params(kp, L, H, C, K, S, temperature=1.0)

    try:
        out = jax.block_until_ready(
            lift_forward(params, x, y_hat, leader_ids, shift, r, K,
                         single_buffer_consts=True))
    except Exception:
        # pipeline_mode=pl.Buffered(1) not supported on this jax/libtpu build:
        # fall back to default double-buffered constant blocks.
        out = jax.block_until_ready(
            lift_forward(params, x, y_hat, leader_ids, shift, r, K,
                         single_buffer_consts=False))
    assert out.shape == (B, H, C)

    ref = lift_reference(params, x, y_hat, leader_ids, shift, r, K)
    # tolerance accounts for bf16 MXU operands (classifier / mix-head) and the bf16
    # normalized-sequence slab; the DFT dots accumulate in f32 from f32 operands.
    np.testing.assert_allclose(np.asarray(out), np.asarray(ref), rtol=5e-2, atol=1e-1)

    print("KERNEL_OK")
</pallas_src>

<mosaic_0001>
module attributes {stable_mosaic.version = 11 : i64} {
  func.func @kernel(%arg0: i32, %arg1: memref<8x16xf32, #tpu.memory_space<vmem>>, %arg2: memref<8x128xf32, #tpu.memory_space<vmem>>, %arg3: memref<8x128xbf16, #tpu.memory_space<vmem>>) attributes {dimension_semantics = [#tpu.dimension_semantics<parallel>], iteration_bounds = array<i64: 2>, scalar_prefetch = 0 : i64, scratch_operands = 0 : i64, tpu.core_type = #tpu.core_type<tc>, window_params = [{transform_indices = @transform_0, window_bounds = array<i64: 8, 16>}, {transform_indices = @transform_1, window_bounds = array<i64: 8, 128>}, {transform_indices = @transform_2, window_bounds = array<i64: 8, 128>}]} {
    %c0 = arith.constant 0 : index
    %c0_0 = arith.constant 0 : index
    %0 = vector.load %arg1[%c0, %c0_0] : memref<8x16xf32, #tpu.memory_space<vmem>>, vector<8x16xf32>
    %c0_1 = arith.constant 0 : index
    %c0_2 = arith.constant 0 : index
    %1 = vector.load %arg2[%c0_1, %c0_2] : memref<8x128xf32, #tpu.memory_space<vmem>>, vector<8x128xf32>
    %cst = arith.constant dense<0.000000e+00> : vector<8xf32>
    %2 = vector.multi_reduction <add>, %0, %cst [1] : vector<8x16xf32> to vector<8xf32>
    %3 = vector.shape_cast %2 : vector<8xf32> to vector<8x1xf32>
    %cst_3 = arith.constant 1.600000e+01 : f32
    %4 = vector.broadcast %cst_3 : f32 to vector<8x1xf32>
    %5 = arith.divf %3, %4 : vector<8x1xf32>
    %6 = vector.broadcast %5 : vector<8x1xf32> to vector<8x16xf32>
    %7 = arith.subf %0, %6 : vector<8x16xf32>
    %8 = arith.mulf %7, %7 : vector<8x16xf32>
    %cst_4 = arith.constant dense<0.000000e+00> : vector<8xf32>
    %9 = vector.multi_reduction <add>, %8, %cst_4 [1] : vector<8x16xf32> to vector<8xf32>
    %10 = vector.shape_cast %9 : vector<8xf32> to vector<8x1xf32>
    %cst_5 = arith.constant 1.600000e+01 : f32
    %11 = vector.broadcast %cst_5 : f32 to vector<8x1xf32>
    %12 = arith.divf %10, %11 : vector<8x1xf32>
    %cst_6 = arith.constant 9.99999993E-9 : f32
    %13 = vector.broadcast %cst_6 : f32 to vector<8x1xf32>
    %14 = arith.addf %12, %13 : vector<8x1xf32>
    %15 = math.sqrt %14 : vector<8x1xf32>
    %cst_7 = arith.constant 1.000000e+00 : f32
    %16 = vector.broadcast %cst_7 : f32 to vector<8x1xf32>
    %17 = arith.divf %16, %15 : vector<8x1xf32>
    %18 = vector.broadcast %17 : vector<8x1xf32> to vector<8x16xf32>
    %19 = arith.mulf %7, %18 : vector<8x16xf32>
    %20 = vector.extract_strided_slice %1 {offsets = [0, 0], sizes = [8, 16], strides = [1, 1]} : vector<8x128xf32> to vector<8x16xf32>
    %21 = vector.broadcast %5 : vector<8x1xf32> to vector<8x16xf32>
    %22 = arith.subf %20, %21 : vector<8x16xf32>
    %23 = vector.broadcast %17 : vector<8x1xf32> to vector<8x16xf32>
    %24 = arith.mulf %22, %23 : vector<8x16xf32>
    %cst_8 = arith.constant 0.000000e+00 : f32
    %25 = vector.broadcast %cst_8 : f32 to vector<8x96xf32>
    %26 = tpu.concatenate %19, %24, %25 in 1 : vector<8x16xf32>, vector<8x16xf32>, vector<8x96xf32> -> vector<8x128xf32>
    %27 = arith.truncf %26 : vector<8x128xf32> to vector<8x128xbf16>
    %c0_9 = arith.constant 0 : index
    %c0_10 = arith.constant 0 : index
    %28 = vector.load %arg3[%c0_9, %c0_10] : memref<8x128xbf16, #tpu.memory_space<vmem>>, vector<8x128xbf16>
    tpu.vector_store %arg3[%c0_9, %c0_10], %27 {strides = array<i32>} : memref<8x128xbf16, #tpu.memory_space<vmem>>, vector<8x128xbf16>,
    return
  }
  func.func @transform_0(%arg0: i32) -> (i32, i32) {
    %c0_i32 = arith.constant 0 : i32
    %c0_i32_0 = arith.constant 0 : i32
    return %arg0, %c0_i32 : i32, i32
  }
  func.func @transform_1(%arg0: i32) -> (i32, i32) {
    %c0_i32 = arith.constant 0 : i32
    %c0_i32_0 = arith.constant 0 : i32
    return %arg0, %c0_i32 : i32, i32
  }
  func.func @transform_2(%arg0: i32) -> (i32, i32) {
    %c0_i32 = arith.constant 0 : i32
    %c0_i32_0 = arith.constant 0 : i32
    return %arg0, %c0_i32 : i32, i32
  }
}

module attributes {stable_mosaic.version = 11 : i64} {
  func.func @kernel(%arg0: i32, %arg1: memref<8x16xf32, #tpu.memory_space<vmem>>, %arg2: memref<8x128xf32, #tpu.memory_space<vmem>>, %arg3: memref<8x128xbf16, #tpu.memory_space<vmem>>) attributes {dimension_semantics = [#tpu.dimension_semantics<parallel>], iteration_bounds = array<i64: 2>, scalar_prefetch = 0 : i64, scratch_operands = 0 : i64, tpu.core_type = #tpu.core_type<tc>, window_params = [{transform_indices = @transform_0, window_bounds = array<i64: 8, 16>}, {transform_indices = @transform_1, window_bounds = array<i64: 8, 128>}, {transform_indices = @transform_2, window_bounds = array<i64: 8, 128>}]} {
    %c0 = arith.constant 0 : index
    %c0_0 = arith.constant 0 : index
    %0 = vector.load %arg1[%c0, %c0_0] : memref<8x16xf32, #tpu.memory_space<vmem>>, vector<8x16xf32>
    %c0_1 = arith.constant 0 : index
    %c0_2 = arith.constant 0 : index
    %1 = vector.load %arg2[%c0_1, %c0_2] : memref<8x128xf32, #tpu.memory_space<vmem>>, vector<8x128xf32>
    %cst = arith.constant dense<0.000000e+00> : vector<8xf32>
    %2 = vector.multi_reduction <add>, %0, %cst [1] : vector<8x16xf32> to vector<8xf32>
    %3 = vector.shape_cast %2 : vector<8xf32> to vector<8x1xf32>
    %cst_3 = arith.constant 1.600000e+01 : f32
    %4 = vector.broadcast %cst_3 : f32 to vector<8x1xf32>
    %5 = arith.divf %3, %4 : vector<8x1xf32>
    %6 = vector.broadcast %5 : vector<8x1xf32> to vector<8x16xf32>
    %7 = arith.subf %0, %6 : vector<8x16xf32>
    %8 = arith.mulf %7, %7 : vector<8x16xf32>
    %cst_4 = arith.constant dense<0.000000e+00> : vector<8xf32>
    %9 = vector.multi_reduction <add>, %8, %cst_4 [1] : vector<8x16xf32> to vector<8xf32>
    %10 = vector.shape_cast %9 : vector<8xf32> to vector<8x1xf32>
    %cst_5 = arith.constant 1.600000e+01 : f32
    %11 = vector.broadcast %cst_5 : f32 to vector<8x1xf32>
    %12 = arith.divf %10, %11 : vector<8x1xf32>
    %cst_6 = arith.constant 9.99999993E-9 : f32
    %13 = vector.broadcast %cst_6 : f32 to vector<8x1xf32>
    %14 = arith.addf %12, %13 : vector<8x1xf32>
    %15 = math.sqrt %14 : vector<8x1xf32>
    %cst_7 = arith.constant 1.000000e+00 : f32
    %16 = vector.broadcast %cst_7 : f32 to vector<8x1xf32>
    %17 = arith.divf %16, %15 : vector<8x1xf32>
    %18 = vector.broadcast %17 : vector<8x1xf32> to vector<8x16xf32>
    %19 = arith.mulf %7, %18 : vector<8x16xf32>
    %20 = vector.extract_strided_slice %1 {offsets = [0, 0], sizes = [8, 16], strides = [1, 1]} : vector<8x128xf32> to vector<8x16xf32>
    %21 = vector.broadcast %5 : vector<8x1xf32> to vector<8x16xf32>
    %22 = arith.subf %20, %21 : vector<8x16xf32>
    %23 = vector.broadcast %17 : vector<8x1xf32> to vector<8x16xf32>
    %24 = arith.mulf %22, %23 : vector<8x16xf32>
    %cst_8 = arith.constant 0.000000e+00 : f32
    %25 = vector.broadcast %cst_8 : f32 to vector<8x96xf32>
    %26 = tpu.concatenate %19, %24, %25 in 1 : vector<8x16xf32>, vector<8x16xf32>, vector<8x96xf32> -> vector<8x128xf32>
    %27 = arith.truncf %26 : vector<8x128xf32> to vector<8x128xbf16>
    %c0_9 = arith.constant 0 : index
    %c0_10 = arith.constant 0 : index
    %28 = vector.load %arg3[%c0_9, %c0_10] : memref<8x128xbf16, #tpu.memory_space<vmem>>, vector<8x128xbf16>
    tpu.vector_store %arg3[%c0_9, %c0_10], %27 {strides = array<i32>} : memref<8x128xbf16, #tpu.memory_space<vmem>>, vector<8x128xbf16>,
    return
  }
  func.func @transform_0(%arg0: i32) -> (i32, i32) {
    %c0_i32 = arith.constant 0 : i32
    %c0_i32_0 = arith.constant 0 : i32
    return %arg0, %c0_i32 : i32, i32
  }
  func.func @transform_1(%arg0: i32) -> (i32, i32) {
    %c0_i32 = arith.constant 0 : i32
    %c0_i32_0 = arith.constant 0 : i32
    return %arg0, %c0_i32 : i32, i32
  }
  func.func @transform_2(%arg0: i32) -> (i32, i32) {
    %c0_i32 = arith.constant 0 : i32
    %c0_i32_0 = arith.constant 0 : i32
    return %arg0, %c0_i32 : i32, i32
  }
}

</mosaic_0001>

<llo_original>
// kernel: tpu_custom_call.1
$region0: #{tpu_custom_call.1}
  #allocation0 [shape = 'u32[]', space=smem, size = 0x4, offset = 0x4, fixed_abs, tag = 'smem constant byte address 0x4 - core index']
  #allocation1 [shape = 'u32[144,128]{1,0:T(1,128)}', space=vmem, size = 0x12000, scoped, tag = 'internal scratch']
  %s0 = inlined_call_operand.hbm [shape: f32[16,16], index: 0, kind: input, shape index: {}]
  %s1 = inlined_call_operand.hbm [shape: f32[16,128], index: 1, kind: input, shape index: {}]
  %s2 = inlined_call_operand.hbm [shape: bf16[16,128], index: 2, kind: output, shape index: {}]
  %s3 = sld [smem:[#allocation0]]
  $region49: #{tpu_custom_call.1} parent=0
    _
  %s5 = ssub.s32 1, %s3
  %s6 = scalar_select 0, %s5, %s3
  $region1: #{tpu_custom_call.1} parent=0
    #allocation2 [shape = 'u8[8192]{0}', space=vmem, size = 0x2000, scoped, tag = 'input window, operand 0']
    #allocation3 [shape = 's32[2]{0}', space=sflag, size = 0x8, scoped, tag = 'scoped memory for tpu_custom_call.1']
    #allocation4 [shape = 's32[2]{0}', space=sflag, size = 0x8, scoped, tag = 'scoped memory for tpu_custom_call.1']
    #allocation5 [shape = 'u8[8192]{0}', space=vmem, size = 0x2000, scoped, tag = 'input window, operand 1']
    #allocation6 [shape = 's32[2]{0}', space=sflag, size = 0x8, scoped, tag = 'scoped memory for tpu_custom_call.1']
    #allocation7 [shape = 'u8[4096]{0}', space=vmem, size = 0x1000, scoped, tag = 'output window, operand 0']
    %7 = vsyncpa [#allocation3], 0
    %s8 = scalar_lea.sflag [#allocation3], 1
    %9 = vsyncpa %s8, 0
    %10 = vsyncpa [#allocation6], 0
    %s11 = scalar_lea.sflag [#allocation6], 1
    %12 = vsyncpa %s11, 0
    %13 = vsyncpa [#allocation4], 0
    %s14 = scalar_lea.sflag [#allocation4], 1
    %15 = vsyncpa %s14, 0
    loop: start=0, step=1, limit=4
    $region2: #{tpu_custom_call.1} parent=1 // loop_pre_header
      _
    $region3: #{tpu_custom_call.1} parent=1 // loop_header
      %s17 = sphi 0, %s21
      %p18 = scmp.ge.s32.totalorder %s17, 4
      %s27 = sphi 0, %s29
      %s30 = sphi 0, %s27
      %s31 = sphi 0, %s30
      %s47 = sphi 0, %s31
      %s53 = sphi 0, %s55
      %s56 = sphi 0, %s53
      %s57 = sphi 0, %s56
      %s73 = sphi 0, %s57
      %s79 = sphi 0, %s81
      %s82 = sphi 0, %s79
      %s83 = sphi 0, %s82
      %s99 = sphi 0, %s83
    $region4: #{tpu_custom_call.1} parent=1 // loop_header_branch
      %20 = sbr.rel (%p18) target = $region8
    $region5: #{tpu_custom_call.1} parent=1 // loop_body
      %s22 = ssub.s32 %s17, 1
      %s23 = ssub.s32 %s17, 2
      %s24 = sadd.s32 %s17, 1
      %s25 = ssub.s32 %s17, %s24
      %p26 = scmp.eq.s32.totalorder %s25, 0
      %s28 = sadd.s32 %s27, 1
      %s29 = scalar_select %p26, %s27, %s28
      %p32 = pneg %p26
      %p33 = scmp.eq.s32.totalorder %s17, 1
      %p34 = por %p32, %p33
      %p35 = scmp.ne.s32.totalorder %s27, %s30
      %p36 = scmp.eq.s32.totalorder %s17, 0
      %p37 = por %p35, %p36
      %p38 = scmp.ne.s32.totalorder %s27, %s30
      %p39 = scmp.eq.s32.totalorder %s22, 1
      %p40 = por %p38, %p39
      %p41 = scmp.ne.s32.totalorder %s30, %s31
      %p42 = scmp.eq.s32.totalorder %s22, 0
      %p43 = por %p41, %p42
      %p44 = scmp.ne.s32.totalorder %s30, %s31
      %p45 = scmp.eq.s32.totalorder %s23, 1
      %p46 = por %p44, %p45
      %p48 = scmp.ne.s32.totalorder %s31, %s47
      %p49 = scmp.eq.s32.totalorder %s23, 0
      %p50 = por %p48, %p49
      %s51 = ssub.s32 %s17, %s24
      %p52 = scmp.eq.s32.totalorder %s51, 0
      %s54 = sadd.s32 %s53, 1
      %s55 = scalar_select %p52, %s53, %s54
      %p58 = pneg %p52
      %p59 = scmp.eq.s32.totalorder %s17, 1
      %p60 = por %p58, %p59
      %p61 = scmp.ne.s32.totalorder %s53, %s56
      %p62 = scmp.eq.s32.totalorder %s17, 0
      %p63 = por %p61, %p62
      %p64 = scmp.ne.s32.totalorder %s53, %s56
      %p65 = scmp.eq.s32.totalorder %s22, 1
      %p66 = por %p64, %p65
      %p67 = scmp.ne.s32.totalorder %s56, %s57
      %p68 = scmp.eq.s32.totalorder %s22, 0
      %p69 = por %p67, %p68
      %p70 = scmp.ne.s32.totalorder %s56, %s57
      %p71 = scmp.eq.s32.totalorder %s23, 1
      %p72 = por %p70, %p71
      %p74 = scmp.ne.s32.totalorder %s57, %s73
      %p75 = scmp.eq.s32.totalorder %s23, 0
      %p76 = por %p74, %p75
      %s77 = ssub.s32 %s17, %s24
      %p78 = scmp.eq.s32.totalorder %s77, 0
      %s80 = sadd.s32 %s79, 1
      %s81 = scalar_select %p78, %s79, %s80
      %p84 = pneg %p78
      %p85 = scmp.eq.s32.totalorder %s17, 1
      %p86 = por %p84, %p85
      %p87 = scmp.ne.s32.totalorder %s79, %s82
      %p88 = scmp.eq.s32.totalorder %s17, 0
      %p89 = por %p87, %p88
      %p90 = scmp.ne.s32.totalorder %s79, %s82
      %p91 = scmp.eq.s32.totalorder %s22, 1
      %p92 = por %p90, %p91
      %p93 = scmp.ne.s32.totalorder %s82, %s83
      %p94 = scmp.eq.s32.totalorder %s22, 0
      %p95 = por %p93, %p94
      %p96 = scmp.ne.s32.totalorder %s82, %s83
      %p97 = scmp.eq.s32.totalorder %s23, 1
      %p98 = por %p96, %p97
      %p100 = scmp.ne.s32.totalorder %s83, %s99
      %p101 = scmp.eq.s32.totalorder %s23, 0
      %p102 = por %p100, %p101
      %p103 = scmp.le.s32.totalorder 1, %s17
      %p104 = scmp.lt.s32.totalorder %s17, 3
      %p105 = pnand %p103, %p104
      %p106 = pneg %p105
      // Predicated region
      $region9: #{tpu_custom_call.1} parent=5 // pred_check
        _
      $region10: #{tpu_custom_call.1} parent=5 // pred_check_branch
        %108 = sbr.rel (%p105) target = $region12
      $region11: #{tpu_custom_call.1} parent=5 // pred_region
        %s109 = ssub.s32 %s17, 1
      $region12: #{tpu_custom_call.1} parent=5 // pred_fallthru
        _
      %p110 = scmp.lt.s32.totalorder %s17, 2
      // Predicated region
      $region13: #{tpu_custom_call.1} parent=5 // pred_check
        %p111 = pneg %p110
      $region14: #{tpu_custom_call.1} parent=5 // pred_check_branch
        %113 = sbr.rel (%p111) target = $region16
      $region15: #{tpu_custom_call.1} parent=5 // pred_region
        // Predicated region
        $region17: #{tpu_custom_call.1} parent=15 // pred_check
          %p114 = pneg %p37
        $region18: #{tpu_custom_call.1} parent=15 // pred_check_branch
          %116 = sbr.rel (%p114) target = $region20
        $region19: #{tpu_custom_call.1} parent=15 // pred_region
          %s117 = sand.u32 %s27, 1
          %s118 = scalar_lea.sflag [#allocation3], %s117
          %s119 = sand.u32 %s27, 1
          %s120 = smul.addr %s119, 8
          %s121 = scalar_lea.vmem [#allocation2], %s120
          %s123 = ssub.s32 128, 128
          %124 = vsyncadd %s118, %s123
          %s125 = smul.addr %s17, 128
          %s126 = scalar_lea.hbm %s0, %s125
          %s128 = sshll.u32 %s121, 4
          %s129 = int_to_ptr.vmem [resolvable:$true] %s128
          %131 = dma.hbm_to_vmem [thread:$0]  %s126, 128, %s129, %s118
        $region20: #{tpu_custom_call.1} parent=15 // pred_fallthru
          _
        // Predicated region
        $region21: #{tpu_custom_call.1} parent=15 // pred_check
          %p132 = pneg %p63
        $region22: #{tpu_custom_call.1} parent=15 // pred_check_branch
          %134 = sbr.rel (%p132) target = $region24
        $region23: #{tpu_custom_call.1} parent=15 // pred_region
          %s135 = sand.u32 %s53, 1
          %s136 = scalar_lea.sflag [#allocation6], %s135
          %s137 = sand.u32 %s53, 1
          %s138 = smul.addr %s137, 8
          %s139 = scalar_lea.vmem [#allocation5], %s138
          %s141 = ssub.s32 128, 128
          %142 = vsyncadd %s136, %s141
          %s143 = smul.addr %s17, 128
          %s144 = scalar_lea.hbm %s1, %s143
          %s146 = sshll.u32 %s139, 4
          %s147 = int_to_ptr.vmem [resolvable:$true] %s146
          %149 = dma.hbm_to_vmem [thread:$0]  %s144, 128, %s147, %s136
        $region24: #{tpu_custom_call.1} parent=15 // pred_fallthru
          _
      $region16: #{tpu_custom_call.1} parent=5 // pred_fallthru
        _
      %p150 = scmp.le.s32.totalorder 1, %s17
      %p151 = scmp.lt.s32.totalorder %s17, 3
      %p152 = pnand %p150, %p151
      %p153 = pneg %p152
      // Predicated region
      $region25: #{tpu_custom_call.1} parent=5 // pred_check
        _
      $region26: #{tpu_custom_call.1} parent=5 // pred_check_branch
        %155 = sbr.rel (%p152) target = $region28
      $region27: #{tpu_custom_call.1} parent=5 // pred_region
        %s156 = ssub.s32 %s17, 1
        %s157 = sand.u32 %s30, 1
        %s158 = scalar_lea.sflag [#allocation3], %s157
        %s159 = sand.u32 %s30, 1
        %s160 = smul.addr %s159, 8
        %s161 = scalar_lea.vmem [#allocation2], %s160
        // Predicated region
        $region29: #{tpu_custom_call.1} parent=27 // pred_check
          %p162 = pneg %p43
        $region30: #{tpu_custom_call.1} parent=27 // pred_check_branch
          %164 = sbr.rel (%p162) target = $region32
        $region31: #{tpu_custom_call.1} parent=27 // pred_region
          %165 = dma.done %s158, 128
        $region32: #{tpu_custom_call.1} parent=27 // pred_fallthru
          _
        %s166 = sand.u32 %s56, 1
        %s167 = scalar_lea.sflag [#allocation6], %s166
        %s168 = sand.u32 %s56, 1
        %s169 = smul.addr %s168, 8
        %s170 = scalar_lea.vmem [#allocation5], %s169
        // Predicated region
        $region33: #{tpu_custom_call.1} parent=27 // pred_check
          %p171 = pneg %p69
        $region34: #{tpu_custom_call.1} parent=27 // pred_check_branch
          %173 = sbr.rel (%p171) target = $region36
        $region35: #{tpu_custom_call.1} parent=27 // pred_region
          %174 = dma.done %s167, 128
        $region36: #{tpu_custom_call.1} parent=27 // pred_fallthru
          _
        %s175 = sand.u32 %s30, 1
        %s176 = scalar_lea.sflag [#allocation3], %s175
        %s177 = sand.u32 %s30, 1
        %s178 = smul.addr %s177, 8
        %s179 = scalar_lea.vmem [#allocation2], %s178
        %p180 = pneg %p43
        %p181 = pneg %p40
        %s182 = sand.u32 %s56, 1
        %s183 = scalar_lea.sflag [#allocation6], %s182
        %s184 = sand.u32 %s56, 1
        %s185 = smul.addr %s184, 8
        %s186 = scalar_lea.vmem [#allocation5], %s185
        %p187 = pneg %p69
        %p188 = pneg %p66
        %p189 = pneg %p95
        %p190 = pneg %p92
        %s191 = sand.u32 %s82, 1
        %s192 = scalar_lea.sflag [#allocation4], %s191
        %s193 = sand.u32 %s82, 1
        %s194 = smul.addr %s193, 4
        %s195 = scalar_lea.vmem [#allocation7], %s194
        %v196 = vld [vmem:[%s161] sm:$0xff]
        %v197 = vld [vmem:[%s170] sm:$0xff]
        %vm198 = vcmask 130048
        %v199 = vsel %vm198, %v196, 0.0
        %200 = vadd.xlane.f32.xlu0 %v199
        %v201 = vpop.xlane.xlu0 %200
        %v202 = vrcp.pop 16.0
        %v203 = vmul.f32 %v201, %v202
        %v204 = vsub.f32 %v196, %v203
        %v205 = vmul.f32 %v204, %v204
        %v206 = vsel %vm198, %v205, 0.0
        %207 = vadd.xlane.f32.xlu0 %v206
        %v208 = vpop.xlane.xlu0 %207
        %v209 = vmul.f32 %v208, %v202
        %v210 = vadd.f32 %v209, 1e-08
        %v211 = vrsqrt.pop %v210
        %v212 = vmul.f32 %v210, %v211
        %vm213 = vcmp.eq.f32.partialorder %v210, inf
        %v214 = vsel %vm213, %v210, %v212
        %vm215 = vcmp.eq.f32.partialorder %v210, 0.0
        %v216 = vand.u32 %v210, 2147483648
        %v217 = vsel %vm215, %v216, %v214
        %v218 = vrcp.pop %v217
        %v219 = vmul.f32 1.0, %v218
        %v220 = vmul.f32 %v204, %v219
        %v221 = vsub.f32 %v197, %v203
        %v222 = vmul.f32 %v221, %v219
        %224 = vrot.lane.b32.xlu0 %v222, 16
        %v225 = vpop.permute.xlu0 %224
        %v227 = vsel %vm198, %v220, %v225
        %vm228 = vcmask 261120
        %v229 = vsel %vm228, %v227, 0.0
        %v230 = vpack.c.bf16 %v229, %v229
        %231 = vst [vmem:[%s195] sm:$0xf] %v230
        %s232 = sand.u32 %s82, 1
        %s233 = scalar_lea.sflag [#allocation4], %s232
        %s234 = sand.u32 %s82, 1
        %s235 = smul.addr %s234, 4
        %s236 = scalar_lea.vmem [#allocation7], %s235
        // Predicated region
        $region37: #{tpu_custom_call.1} parent=27 // pred_check
          %p237 = pneg %p92
        $region38: #{tpu_custom_call.1} parent=27 // pred_check_branch
          %239 = sbr.rel (%p237) target = $region40
        $region39: #{tpu_custom_call.1} parent=27 // pred_region
          %s241 = ssub.s32 64, 64
          %242 = vsyncadd %s233, %s241
          %s243 = smul.addr %s22, 64
          %s244 = scalar_lea.hbm %s2, %s243
          %s246 = sshll.u32 %s236, 4
          %s247 = int_to_ptr.vmem [resolvable:$true] %s246
          %249 = dma.vmem_to_hbm [thread:$0]  %s247, 64, %s244, %s233
        $region40: #{tpu_custom_call.1} parent=27 // pred_fallthru
          _
      $region28: #{tpu_custom_call.1} parent=5 // pred_fallthru
        _
      %p250 = scmp.le.s32.totalorder 2, %s17
      // Predicated region
      $region41: #{tpu_custom_call.1} parent=5 // pred_check
        %p251 = pneg %p250
      $region42: #{tpu_custom_call.1} parent=5 // pred_check_branch
        %253 = sbr.rel (%p251) target = $region44
      $region43: #{tpu_custom_call.1} parent=5 // pred_region
        %s254 = ssub.s32 %s17, 2
        // Predicated region
        $region45: #{tpu_custom_call.1} parent=43 // pred_check
          %p255 = pneg %p98
        $region46: #{tpu_custom_call.1} parent=43 // pred_check_branch
          %257 = sbr.rel (%p255) target = $region48
        $region47: #{tpu_custom_call.1} parent=43 // pred_region
          %s258 = sand.u32 %s83, 1
          %s259 = scalar_lea.sflag [#allocation4], %s258
          %s260 = sand.u32 %s83, 1
          %s261 = smul.addr %s260, 4
          %s262 = scalar_lea.vmem [#allocation7], %s261
          %263 = dma.done %s259, 64
        $region48: #{tpu_custom_call.1} parent=43 // pred_fallthru
          _
      $region44: #{tpu_custom_call.1} parent=5 // pred_fallthru
        _
    $region6: #{tpu_custom_call.1} parent=1 // loop_footer
      %s21 = sadd.s32 1, %s17
    $region7: #{tpu_custom_call.1} parent=1 // loop_footer_branch
      %16 = sbr.rel target = $region3
    $region8: #{tpu_custom_call.1} parent=1 // loop_exit
      _
    %264 = vsyncpa [#allocation3], 1
    %s265 = scalar_lea.sflag [#allocation3], 1
    %266 = vsyncpa %s265, 1
    %267 = vsyncpa [#allocation6], 1
    %s268 = scalar_lea.sflag [#allocation6], 1
    %269 = vsyncpa %s268, 1
    %270 = vsyncpa [#allocation4], 1
    %s271 = scalar_lea.sflag [#allocation4], 1
    %272 = vsyncpa %s271, 1

// kernel: tpu_custom_call.1
$region0: #{tpu_custom_call.1}
  #allocation0 [shape = 'u32[]', space=smem, size = 0x4, offset = 0x4, fixed_abs, tag = 'smem constant byte address 0x4 - core index']
  #allocation1 [shape = 'u32[144,128]{1,0:T(1,128)}', space=vmem, size = 0x12000, scoped, tag = 'internal scratch']
  %s0 = inlined_call_operand.hbm [shape: f32[16,16], index: 0, kind: input, shape index: {}]
  %s1 = inlined_call_operand.hbm [shape: f32[16,128], index: 1, kind: input, shape index: {}]
  %s2 = inlined_call_operand.hbm [shape: bf16[16,128], index: 2, kind: output, shape index: {}]
  %s3 = sld [smem:[#allocation0]]
  $region49: #{tpu_custom_call.1} parent=0
    _
  %s5 = ssub.s32 1, %s3
  %s6 = scalar_select 0, %s5, %s3
  $region1: #{tpu_custom_call.1} parent=0
    #allocation2 [shape = 'u8[8192]{0}', space=vmem, size = 0x2000, scoped, tag = 'input window, operand 0']
    #allocation3 [shape = 's32[2]{0}', space=sflag, size = 0x8, scoped, tag = 'scoped memory for tpu_custom_call.1']
    #allocation4 [shape = 's32[2]{0}', space=sflag, size = 0x8, scoped, tag = 'scoped memory for tpu_custom_call.1']
    #allocation5 [shape = 'u8[8192]{0}', space=vmem, size = 0x2000, scoped, tag = 'input window, operand 1']
    #allocation6 [shape = 's32[2]{0}', space=sflag, size = 0x8, scoped, tag = 'scoped memory for tpu_custom_call.1']
    #allocation7 [shape = 'u8[4096]{0}', space=vmem, size = 0x1000, scoped, tag = 'output window, operand 0']
    %7 = vsyncpa [#allocation3], 0
    %s8 = scalar_lea.sflag [#allocation3], 1
    %9 = vsyncpa %s8, 0
    %10 = vsyncpa [#allocation6], 0
    %s11 = scalar_lea.sflag [#allocation6], 1
    %12 = vsyncpa %s11, 0
    %13 = vsyncpa [#allocation4], 0
    %s14 = scalar_lea.sflag [#allocation4], 1
    %15 = vsyncpa %s14, 0
    loop: start=0, step=1, limit=4
    $region2: #{tpu_custom_call.1} parent=1 // loop_pre_header
      _
    $region3: #{tpu_custom_call.1} parent=1 // loop_header
      %s17 = sphi 0, %s21
      %p18 = scmp.ge.s32.totalorder %s17, 4
      %s27 = sphi 0, %s29
      %s30 = sphi 0, %s27
      %s31 = sphi 0, %s30
      %s47 = sphi 0, %s31
      %s53 = sphi 0, %s55
      %s56 = sphi 0, %s53
      %s57 = sphi 0, %s56
      %s73 = sphi 0, %s57
      %s79 = sphi 0, %s81
      %s82 = sphi 0, %s79
      %s83 = sphi 0, %s82
      %s99 = sphi 0, %s83
    $region4: #{tpu_custom_call.1} parent=1 // loop_header_branch
      %20 = sbr.rel (%p18) target = $region8
    $region5: #{tpu_custom_call.1} parent=1 // loop_body
      %s22 = ssub.s32 %s17, 1
      %s23 = ssub.s32 %s17, 2
      %s24 = sadd.s32 %s17, 1
      %s25 = ssub.s32 %s17, %s24
      %p26 = scmp.eq.s32.totalorder %s25, 0
      %s28 = sadd.s32 %s27, 1
      %s29 = scalar_select %p26, %s27, %s28
      %p32 = pneg %p26
      %p33 = scmp.eq.s32.totalorder %s17, 1
      %p34 = por %p32, %p33
      %p35 = scmp.ne.s32.totalorder %s27, %s30
      %p36 = scmp.eq.s32.totalorder %s17, 0
      %p37 = por %p35, %p36
      %p38 = scmp.ne.s32.totalorder %s27, %s30
      %p39 = scmp.eq.s32.totalorder %s22, 1
      %p40 = por %p38, %p39
      %p41 = scmp.ne.s32.totalorder %s30, %s31
      %p42 = scmp.eq.s32.totalorder %s22, 0
      %p43 = por %p41, %p42
      %p44 = scmp.ne.s32.totalorder %s30, %s31
      %p45 = scmp.eq.s32.totalorder %s23, 1
      %p46 = por %p44, %p45
      %p48 = scmp.ne.s32.totalorder %s31, %s47
      %p49 = scmp.eq.s32.totalorder %s23, 0
      %p50 = por %p48, %p49
      %s51 = ssub.s32 %s17, %s24
      %p52 = scmp.eq.s32.totalorder %s51, 0
      %s54 = sadd.s32 %s53, 1
      %s55 = scalar_select %p52, %s53, %s54
      %p58 = pneg %p52
      %p59 = scmp.eq.s32.totalorder %s17, 1
      %p60 = por %p58, %p59
      %p61 = scmp.ne.s32.totalorder %s53, %s56
      %p62 = scmp.eq.s32.totalorder %s17, 0
      %p63 = por %p61, %p62
      %p64 = scmp.ne.s32.totalorder %s53, %s56
      %p65 = scmp.eq.s32.totalorder %s22, 1
      %p66 = por %p64, %p65
      %p67 = scmp.ne.s32.totalorder %s56, %s57
      %p68 = scmp.eq.s32.totalorder %s22, 0
      %p69 = por %p67, %p68
      %p70 = scmp.ne.s32.totalorder %s56, %s57
      %p71 = scmp.eq.s32.totalorder %s23, 1
      %p72 = por %p70, %p71
      %p74 = scmp.ne.s32.totalorder %s57, %s73
      %p75 = scmp.eq.s32.totalorder %s23, 0
      %p76 = por %p74, %p75
      %s77 = ssub.s32 %s17, %s24
      %p78 = scmp.eq.s32.totalorder %s77, 0
      %s80 = sadd.s32 %s79, 1
      %s81 = scalar_select %p78, %s79, %s80
      %p84 = pneg %p78
      %p85 = scmp.eq.s32.totalorder %s17, 1
      %p86 = por %p84, %p85
      %p87 = scmp.ne.s32.totalorder %s79, %s82
      %p88 = scmp.eq.s32.totalorder %s17, 0
      %p89 = por %p87, %p88
      %p90 = scmp.ne.s32.totalorder %s79, %s82
      %p91 = scmp.eq.s32.totalorder %s22, 1
      %p92 = por %p90, %p91
      %p93 = scmp.ne.s32.totalorder %s82, %s83
      %p94 = scmp.eq.s32.totalorder %s22, 0
      %p95 = por %p93, %p94
      %p96 = scmp.ne.s32.totalorder %s82, %s83
      %p97 = scmp.eq.s32.totalorder %s23, 1
      %p98 = por %p96, %p97
      %p100 = scmp.ne.s32.totalorder %s83, %s99
      %p101 = scmp.eq.s32.totalorder %s23, 0
      %p102 = por %p100, %p101
      %p103 = scmp.le.s32.totalorder 1, %s17
      %p104 = scmp.lt.s32.totalorder %s17, 3
      %p105 = pnand %p103, %p104
      %p106 = pneg %p105
      // Predicated region
      $region9: #{tpu_custom_call.1} parent=5 // pred_check
        _
      $region10: #{tpu_custom_call.1} parent=5 // pred_check_branch
        %108 = sbr.rel (%p105) target = $region12
      $region11: #{tpu_custom_call.1} parent=5 // pred_region
        %s109 = ssub.s32 %s17, 1
      $region12: #{tpu_custom_call.1} parent=5 // pred_fallthru
        _
      %p110 = scmp.lt.s32.totalorder %s17, 2
      // Predicated region
      $region13: #{tpu_custom_call.1} parent=5 // pred_check
        %p111 = pneg %p110
      $region14: #{tpu_custom_call.1} parent=5 // pred_check_branch
        %113 = sbr.rel (%p111) target = $region16
      $region15: #{tpu_custom_call.1} parent=5 // pred_region
        // Predicated region
        $region17: #{tpu_custom_call.1} parent=15 // pred_check
          %p114 = pneg %p37
        $region18: #{tpu_custom_call.1} parent=15 // pred_check_branch
          %116 = sbr.rel (%p114) target = $region20
        $region19: #{tpu_custom_call.1} parent=15 // pred_region
          %s117 = sand.u32 %s27, 1
          %s118 = scalar_lea.sflag [#allocation3], %s117
          %s119 = sand.u32 %s27, 1
          %s120 = smul.addr %s119, 8
          %s121 = scalar_lea.vmem [#allocation2], %s120
          %s123 = ssub.s32 128, 128
          %124 = vsyncadd %s118, %s123
          %s125 = smul.addr %s17, 128
          %s126 = scalar_lea.hbm %s0, %s125
          %s128 = sshll.u32 %s121, 4
          %s129 = int_to_ptr.vmem [resolvable:$true] %s128
          %131 = dma.hbm_to_vmem [thread:$0]  %s126, 128, %s129, %s118
        $region20: #{tpu_custom_call.1} parent=15 // pred_fallthru
          _
        // Predicated region
        $region21: #{tpu_custom_call.1} parent=15 // pred_check
          %p132 = pneg %p63
        $region22: #{tpu_custom_call.1} parent=15 // pred_check_branch
          %134 = sbr.rel (%p132) target = $region24
        $region23: #{tpu_custom_call.1} parent=15 // pred_region
          %s135 = sand.u32 %s53, 1
          %s136 = scalar_lea.sflag [#allocation6], %s135
          %s137 = sand.u32 %s53, 1
          %s138 = smul.addr %s137, 8
          %s139 = scalar_lea.vmem [#allocation5], %s138
          %s141 = ssub.s32 128, 128
          %142 = vsyncadd %s136, %s141
          %s143 = smul.addr %s17, 128
          %s144 = scalar_lea.hbm %s1, %s143
          %s146 = sshll.u32 %s139, 4
          %s147 = int_to_ptr.vmem [resolvable:$true] %s146
          %149 = dma.hbm_to_vmem [thread:$0]  %s144, 128, %s147, %s136
        $region24: #{tpu_custom_call.1} parent=15 // pred_fallthru
          _
      $region16: #{tpu_custom_call.1} parent=5 // pred_fallthru
        _
      %p150 = scmp.le.s32.totalorder 1, %s17
      %p151 = scmp.lt.s32.totalorder %s17, 3
      %p152 = pnand %p150, %p151
      %p153 = pneg %p152
      // Predicated region
      $region25: #{tpu_custom_call.1} parent=5 // pred_check
        _
      $region26: #{tpu_custom_call.1} parent=5 // pred_check_branch
        %155 = sbr.rel (%p152) target = $region28
      $region27: #{tpu_custom_call.1} parent=5 // pred_region
        %s156 = ssub.s32 %s17, 1
        %s157 = sand.u32 %s30, 1
        %s158 = scalar_lea.sflag [#allocation3], %s157
        %s159 = sand.u32 %s30, 1
        %s160 = smul.addr %s159, 8
        %s161 = scalar_lea.vmem [#allocation2], %s160
        // Predicated region
        $region29: #{tpu_custom_call.1} parent=27 // pred_check
          %p162 = pneg %p43
        $region30: #{tpu_custom_call.1} parent=27 // pred_check_branch
          %164 = sbr.rel (%p162) target = $region32
        $region31: #{tpu_custom_call.1} parent=27 // pred_region
          %165 = dma.done %s158, 128
        $region32: #{tpu_custom_call.1} parent=27 // pred_fallthru
          _
        %s166 = sand.u32 %s56, 1
        %s167 = scalar_lea.sflag [#allocation6], %s166
        %s168 = sand.u32 %s56, 1
        %s169 = smul.addr %s168, 8
        %s170 = scalar_lea.vmem [#allocation5], %s169
        // Predicated region
        $region33: #{tpu_custom_call.1} parent=27 // pred_check
          %p171 = pneg %p69
        $region34: #{tpu_custom_call.1} parent=27 // pred_check_branch
          %173 = sbr.rel (%p171) target = $region36
        $region35: #{tpu_custom_call.1} parent=27 // pred_region
          %174 = dma.done %s167, 128
        $region36: #{tpu_custom_call.1} parent=27 // pred_fallthru
          _
        %s175 = sand.u32 %s30, 1
        %s176 = scalar_lea.sflag [#allocation3], %s175
        %s177 = sand.u32 %s30, 1
        %s178 = smul.addr %s177, 8
        %s179 = scalar_lea.vmem [#allocation2], %s178
        %p180 = pneg %p43
        %p181 = pneg %p40
        %s182 = sand.u32 %s56, 1
        %s183 = scalar_lea.sflag [#allocation6], %s182
        %s184 = sand.u32 %s56, 1
        %s185 = smul.addr %s184, 8
        %s186 = scalar_lea.vmem [#allocation5], %s185
        %p187 = pneg %p69
        %p188 = pneg %p66
        %p189 = pneg %p95
        %p190 = pneg %p92
        %s191 = sand.u32 %s82, 1
        %s192 = scalar_lea.sflag [#allocation4], %s191
        %s193 = sand.u32 %s82, 1
        %s194 = smul.addr %s193, 4
        %s195 = scalar_lea.vmem [#allocation7], %s194
        %v196 = vld [vmem:[%s161] sm:$0xff]
        %v197 = vld [vmem:[%s170] sm:$0xff]
        %vm198 = vcmask 130048
        %v199 = vsel %vm198, %v196, 0.0
        %200 = vadd.xlane.f32.xlu0 %v199
        %v201 = vpop.xlane.xlu0 %200
        %v202 = vrcp.pop 16.0
        %v203 = vmul.f32 %v201, %v202
        %v204 = vsub.f32 %v196, %v203
        %v205 = vmul.f32 %v204, %v204
        %v206 = vsel %vm198, %v205, 0.0
        %207 = vadd.xlane.f32.xlu0 %v206
        %v208 = vpop.xlane.xlu0 %207
        %v209 = vmul.f32 %v208, %v202
        %v210 = vadd.f32 %v209, 1e-08
        %v211 = vrsqrt.pop %v210
        %v212 = vmul.f32 %v210, %v211
        %vm213 = vcmp.eq.f32.partialorder %v210, inf
        %v214 = vsel %vm213, %v210, %v212
        %vm215 = vcmp.eq.f32.partialorder %v210, 0.0
        %v216 = vand.u32 %v210, 2147483648
        %v217 = vsel %vm215, %v216, %v214
        %v218 = vrcp.pop %v217
        %v219 = vmul.f32 1.0, %v218
        %v220 = vmul.f32 %v204, %v219
        %v221 = vsub.f32 %v197, %v203
        %v222 = vmul.f32 %v221, %v219
        %224 = vrot.lane.b32.xlu0 %v222, 16
        %v225 = vpop.permute.xlu0 %224
        %v227 = vsel %vm198, %v220, %v225
        %vm228 = vcmask 261120
        %v229 = vsel %vm228, %v227, 0.0
        %v230 = vpack.c.bf16 %v229, %v229
        %231 = vst [vmem:[%s195] sm:$0xf] %v230
        %s232 = sand.u32 %s82, 1
        %s233 = scalar_lea.sflag [#allocation4], %s232
        %s234 = sand.u32 %s82, 1
        %s235 = smul.addr %s234, 4
        %s236 = scalar_lea.vmem [#allocation7], %s235
        // Predicated region
        $region37: #{tpu_custom_call.1} parent=27 // pred_check
          %p237 = pneg %p92
        $region38: #{tpu_custom_call.1} parent=27 // pred_check_branch
          %239 = sbr.rel (%p237) target = $region40
        $region39: #{tpu_custom_call.1} parent=27 // pred_region
          %s241 = ssub.s32 64, 64
          %242 = vsyncadd %s233, %s241
          %s243 = smul.addr %s22, 64
          %s244 = scalar_lea.hbm %s2, %s243
          %s246 = sshll.u32 %s236, 4
          %s247 = int_to_ptr.vmem [resolvable:$true] %s246
          %249 = dma.vmem_to_hbm [thread:$0]  %s247, 64, %s244, %s233
        $region40: #{tpu_custom_call.1} parent=27 // pred_fallthru
          _
      $region28: #{tpu_custom_call.1} parent=5 // pred_fallthru
        _
      %p250 = scmp.le.s32.totalorder 2, %s17
      // Predicated region
      $region41: #{tpu_custom_call.1} parent=5 // pred_check
        %p251 = pneg %p250
      $region42: #{tpu_custom_call.1} parent=5 // pred_check_branch
        %253 = sbr.rel (%p251) target = $region44
      $region43: #{tpu_custom_call.1} parent=5 // pred_region
        %s254 = ssub.s32 %s17, 2
        // Predicated region
        $region45: #{tpu_custom_call.1} parent=43 // pred_check
          %p255 = pneg %p98
        $region46: #{tpu_custom_call.1} parent=43 // pred_check_branch
          %257 = sbr.rel (%p255) target = $region48
        $region47: #{tpu_custom_call.1} parent=43 // pred_region
          %s258 = sand.u32 %s83, 1
          %s259 = scalar_lea.sflag [#allocation4], %s258
          %s260 = sand.u32 %s83, 1
          %s261 = smul.addr %s260, 4
          %s262 = scalar_lea.vmem [#allocation7], %s261
          %263 = dma.done %s259, 64
        $region48: #{tpu_custom_call.1} parent=43 // pred_fallthru
          _
      $region44: #{tpu_custom_call.1} parent=5 // pred_fallthru
        _
    $region6: #{tpu_custom_call.1} parent=1 // loop_footer
      %s21 = sadd.s32 1, %s17
    $region7: #{tpu_custom_call.1} parent=1 // loop_footer_branch
      %16 = sbr.rel target = $region3
    $region8: #{tpu_custom_call.1} parent=1 // loop_exit
      _
    %264 = vsyncpa [#allocation3], 1
    %s265 = scalar_lea.sflag [#allocation3], 1
    %266 = vsyncpa %s265, 1
    %267 = vsyncpa [#allocation6], 1
    %s268 = scalar_lea.sflag [#allocation6], 1
    %269 = vsyncpa %s268, 1
    %270 = vsyncpa [#allocation4], 1
    %s271 = scalar_lea.sflag [#allocation4], 1
    %272 = vsyncpa %s271, 1

</llo_original>
